<compile_context>
chip_gen: v7x
topology: tpu7x:2x2x1
jax: 0.10.0
libtpu: 0.0.40
codegen_flags: <defaults>
</compile_context>

<pallas_src>
import functools

import jax
import jax.numpy as jnp
from jax import lax
from jax.experimental import pallas as pl
from jax.experimental.pallas import tpu as pltpu

GAMMA = 2.0  # focusing parameter; == 2 -> explicit square on the VALU (no pow)


def _focal_kernel(x_ref, t_ref, o_ref, *, hw, tile_hw):
    # x_ref: (1, C, L) logits tile in native dtype (cast to f32 in-kernel)
    # t_ref: (1, 1, L) int32 class indices
    # o_ref: (1, 1, L) f32 per-image lane-partial sums, resident across the s axis
    s = pl.program_id(1)

    @pl.when(s == 0)
    def _():
        o_ref[...] = jnp.zeros_like(o_ref)

    x = x_ref[...].astype(jnp.float32)                  # (1, C, L)
    t = t_ref[...]                                      # (1, 1, L)

    # numerically-stable log-softmax pieces over the class (sublane) axis
    m = jnp.max(x, axis=1, keepdims=True)               # (1, 1, L)
    z = x - m                                           # (1, C, L)
    lse = jnp.log(jnp.sum(jnp.exp(z), axis=1, keepdims=True))   # (1, 1, L)

    # Gather z at the target class without materializing logp / onehot f32 temps.
    classes = lax.broadcasted_iota(jnp.int32, x.shape, 1)        # (1, C, L)
    zt = jnp.sum(jnp.where(classes == t, z, 0.0), axis=1, keepdims=True)
    logpt = zt - lse                                    # (1, 1, L)
    pt = jnp.exp(logpt)
    u = 1.0 - pt
    if GAMMA == 2.0:
        focal = u * u                                   # VALU square, no transcendental
    else:
        focal = jnp.power(u, jnp.float32(GAMMA))
    loss = -focal * logpt                               # (1, 1, L)

    # Mask the ragged spatial tail (last tile may read garbage/NaN OOB lanes).
    lane = lax.broadcasted_iota(jnp.int32, loss.shape, 2)
    rem = hw - s * tile_hw
    loss = jnp.where(lane < rem, loss, 0.0)

    o_ref[...] += loss


def _vmem_budget():
    """(max_block_bytes for the logits tile, scoped vmem_limit_bytes) per chip gen."""
    try:
        kind = jax.devices()[0].device_kind.lower()
    except Exception:
        kind = ""
    if "v5" in kind or "v6" in kind:
        return 4 << 20, 64 * 1024 * 1024   # 128 MiB physical VMEM: go big
    return 2 << 20, 32 * 1024 * 1024       # v7x (64 MiB VMEM) / unknown: conservative


def _choose_tile_hw(hw, c, itemsize, *, max_block_bytes, max_tile=32768):
    """Largest multiple-of-128 spatial tile under the byte cap (no divisibility req)."""
    hw_floor = max(128, (hw // 128) * 128)                       # <= hw when hw >= 128
    by_bytes = (max_block_bytes // max(1, c * itemsize)) // 128 * 128
    return max(128, min(hw_floor, max_tile, by_bytes))


@jax.jit
def focal_loss(logits, targets):
    """logits: (N, C, H, W) float; targets: (N, H, W) int. Returns scalar mean focal loss."""
    N, C, H, W = logits.shape
    HW = H * W

    # Native-layout slab: contiguous reshape only, no transpose, no dtype upcast,
    # and (new) no padding copy — the ragged tail is masked inside the kernel.
    x = logits.reshape(N, C, HW)
    t = targets.reshape(N, 1, HW).astype(jnp.int32)

    max_block_bytes, vmem_limit = _vmem_budget()
    tile_hw = _choose_tile_hw(HW, C, x.dtype.itemsize, max_block_bytes=max_block_bytes)
    num_s = pl.cdiv(HW, tile_hw)

    kernel = functools.partial(_focal_kernel, hw=HW, tile_hw=tile_hw)

    partials = pl.pallas_call(
        kernel,
        out_shape=jax.ShapeDtypeStruct((N, 1, tile_hw), jnp.float32),
        grid_spec=pltpu.PrefetchScalarGridSpec(
            num_scalar_prefetch=0,
            grid=(N, num_s),
            in_specs=[
                pl.BlockSpec((1, C, tile_hw), lambda n, s: (n, 0, s)),
                pl.BlockSpec((1, 1, tile_hw), lambda n, s: (n, 0, s)),
            ],
            out_specs=pl.BlockSpec((1, 1, tile_hw), lambda n, s: (n, 0, 0)),
        ),
        compiler_params=pltpu.CompilerParams(
            # batch axis parallel (megacore can split images); spatial axis is the
            # reduction into the resident per-image accumulator block.
            dimension_semantics=("parallel", "arbitrary"),
            vmem_limit_bytes=vmem_limit,
        ),
    )(x, t)

    return jnp.sum(partials) / (N * HW)  # mean reduction (masked tail contributed 0)


def _reference(logits, targets):
    # pure-JAX reference for sanity checking
    N, C, H, W = logits.shape
    xx = jnp.transpose(logits, (0, 2, 3, 1)).reshape(-1, C).astype(jnp.float32)
    tt = targets.reshape(-1)
    logp = jax.nn.log_softmax(xx, axis=-1)
    logpt = jnp.take_along_axis(logp, tt[:, None], axis=-1)[:, 0]
    pt = jnp.exp(logpt)
    return jnp.mean(-((1.0 - pt) ** GAMMA) * logpt)


if __name__ == "__main__":
    key = jax.random.PRNGKey(0)
    k1, k2, k3, k4 = jax.random.split(key, 4)

    # Primary shape consistent with the module (NCHW logits, class-index targets).
    N, C, H, W = 2, 4, 16, 16
    logits = jax.random.normal(k1, (N, C, H, W), dtype=jnp.float32)
    targets = jax.random.randint(k2, (N, H, W), 0, C, dtype=jnp.int32)
    out = jax.block_until_ready(focal_loss(logits, targets))
    ref = _reference(logits, targets)
    assert jnp.allclose(out, ref, rtol=1e-5, atol=1e-5), (out, ref)

    # Ragged spatial extent (HW=144, not a multiple of 128): exercises the
    # in-kernel tail mask that replaced the wrapper-side jnp.pad.
    N2, C2, H2, W2 = 2, 4, 12, 12
    logits2 = jax.random.normal(k3, (N2, C2, H2, W2), dtype=jnp.float32)
    targets2 = jax.random.randint(k4, (N2, H2, W2), 0, C2, dtype=jnp.int32)
    out2 = jax.block_until_ready(focal_loss(logits2, targets2))
    ref2 = _reference(logits2, targets2)
    assert jnp.allclose(out2, ref2, rtol=1e-5, atol=1e-5), (out2, ref2)

    print("KERNEL_OK")
</pallas_src>

<mosaic_0001>
module attributes {stable_mosaic.version = 11 : i64} {
  func.func @_focal_kernel(%arg0: i32, %arg1: i32, %arg2: memref<1x4x256xf32, #tpu.memory_space<vmem>>, %arg3: memref<1x1x256xi32, #tpu.memory_space<vmem>>, %arg4: memref<1x1x256xf32, #tpu.memory_space<vmem>>) attributes {dimension_semantics = [#tpu.dimension_semantics<parallel>, #tpu.dimension_semantics<arbitrary>], iteration_bounds = array<i64: 2, 1>, scalar_prefetch = 0 : i64, scratch_operands = 0 : i64, tpu.core_type = #tpu.core_type<tc>, window_params = [{transform_indices = @transform_0, window_bounds = array<i64: 1, 4, 256>}, {transform_indices = @transform_1, window_bounds = array<i64: 1, 1, 256>}, {transform_indices = @transform_2, window_bounds = array<i64: 1, 1, 256>}]} {
    %c0_i32 = arith.constant 0 : i32
    %0 = arith.cmpi eq, %arg1, %c0_i32 : i32
    %1 = arith.extui %0 : i1 to i32
    %c0_i32_0 = arith.constant 0 : i32
    %2 = arith.cmpi ne, %1, %c0_i32_0 : i32
    scf.if %2 {
      %cst_19 = arith.constant 0.000000e+00 : f32
      %38 = vector.broadcast %cst_19 : f32 to vector<1x1x256xf32>
      %c0_20 = arith.constant 0 : index
      %c0_21 = arith.constant 0 : index
      %c0_22 = arith.constant 0 : index
      %39 = vector.load %arg4[%c0_20, %c0_21, %c0_22] : memref<1x1x256xf32, #tpu.memory_space<vmem>>, vector<1x1x256xf32>
      tpu.vector_store %arg4[%c0_20, %c0_21, %c0_22], %38 {strides = array<i32>} : memref<1x1x256xf32, #tpu.memory_space<vmem>>, vector<1x1x256xf32>,
    } else {
    }
    %c0 = arith.constant 0 : index
    %c0_1 = arith.constant 0 : index
    %c0_2 = arith.constant 0 : index
    %3 = vector.load %arg2[%c0, %c0_1, %c0_2] : memref<1x4x256xf32, #tpu.memory_space<vmem>>, vector<1x4x256xf32>
    %c0_3 = arith.constant 0 : index
    %c0_4 = arith.constant 0 : index
    %c0_5 = arith.constant 0 : index
    %4 = vector.load %arg3[%c0_3, %c0_4, %c0_5] : memref<1x1x256xi32, #tpu.memory_space<vmem>>, vector<1x1x256xi32>
    %cst = arith.constant dense<0xFF800000> : vector<1x256xf32>
    %5 = vector.multi_reduction <maximumf>, %3, %cst [1] : vector<1x4x256xf32> to vector<1x256xf32>
    %6 = vector.shape_cast %5 : vector<1x256xf32> to vector<1x1x256xf32>
    %7 = vector.broadcast %6 : vector<1x1x256xf32> to vector<1x4x256xf32>
    %8 = arith.subf %3, %7 : vector<1x4x256xf32>
    %9 = math.exp %8 : vector<1x4x256xf32>
    %cst_6 = arith.constant dense<0.000000e+00> : vector<1x256xf32>
    %10 = vector.multi_reduction <add>, %9, %cst_6 [1] : vector<1x4x256xf32> to vector<1x256xf32>
    %11 = vector.shape_cast %10 : vector<1x256xf32> to vector<1x1x256xf32>
    %12 = math.log %11 : vector<1x1x256xf32>
    %13 = tpu.iota {dimensions = array<i32: 1>} : vector<1x4x256xi32>
    %14 = vector.broadcast %4 : vector<1x1x256xi32> to vector<1x4x256xi32>
    %15 = arith.cmpi eq, %13, %14 : vector<1x4x256xi32>
    %cst_7 = arith.constant 0.000000e+00 : f32
    %16 = vector.broadcast %cst_7 : f32 to vector<1x4x256xf32>
    %17 = arith.select %15, %8, %16 : vector<1x4x256xi1>, vector<1x4x256xf32>
    %cst_8 = arith.constant dense<0.000000e+00> : vector<1x256xf32>
    %18 = vector.multi_reduction <add>, %17, %cst_8 [1] : vector<1x4x256xf32> to vector<1x256xf32>
    %19 = vector.shape_cast %18 : vector<1x256xf32> to vector<1x1x256xf32>
    %20 = arith.subf %19, %12 : vector<1x1x256xf32>
    %21 = math.exp %20 : vector<1x1x256xf32>
    %cst_9 = arith.constant 1.000000e+00 : f32
    %22 = vector.broadcast %cst_9 : f32 to vector<1x1x256xf32>
    %23 = arith.subf %22, %21 : vector<1x1x256xf32>
    %24 = arith.mulf %23, %23 : vector<1x1x256xf32>
    %cst_10 = arith.constant 0.000000e+00 : f32
    %25 = vector.broadcast %cst_10 : f32 to vector<1x1x256xf32>
    %26 = arith.subf %25, %24 : vector<1x1x256xf32>
    %27 = arith.mulf %26, %20 : vector<1x1x256xf32>
    %28 = tpu.iota {dimensions = array<i32: 2>} : vector<1x1x256xi32>
    %c256_i32 = arith.constant 256 : i32
    %29 = arith.muli %arg1, %c256_i32 : i32
    %c256_i32_11 = arith.constant 256 : i32
    %30 = arith.subi %c256_i32_11, %29 : i32
    %31 = vector.broadcast %30 : i32 to vector<1x1x256xi32>
    %32 = arith.cmpi slt, %28, %31 : vector<1x1x256xi32>
    %cst_12 = arith.constant 0.000000e+00 : f32
    %33 = vector.broadcast %cst_12 : f32 to vector<1x1x256xf32>
    %34 = arith.select %32, %27, %33 : vector<1x1x256xi1>, vector<1x1x256xf32>
    %c0_13 = arith.constant 0 : index
    %c0_14 = arith.constant 0 : index
    %c0_15 = arith.constant 0 : index
    %35 = vector.load %arg4[%c0_13, %c0_14, %c0_15] : memref<1x1x256xf32, #tpu.memory_space<vmem>>, vector<1x1x256xf32>
    %36 = arith.addf %35, %34 : vector<1x1x256xf32>
    %c0_16 = arith.constant 0 : index
    %c0_17 = arith.constant 0 : index
    %c0_18 = arith.constant 0 : index
    %37 = vector.load %arg4[%c0_16, %c0_17, %c0_18] : memref<1x1x256xf32, #tpu.memory_space<vmem>>, vector<1x1x256xf32>
    tpu.vector_store %arg4[%c0_16, %c0_17, %c0_18], %36 {strides = array<i32>} : memref<1x1x256xf32, #tpu.memory_space<vmem>>, vector<1x1x256xf32>,
    return
  }
  func.func @transform_0(%arg0: i32, %arg1: i32) -> (i32, i32, i32) {
    %c0_i32 = arith.constant 0 : i32
    %c0_i32_0 = arith.constant 0 : i32
    return %arg0, %c0_i32, %arg1 : i32, i32, i32
  }
  func.func @transform_1(%arg0: i32, %arg1: i32) -> (i32, i32, i32) {
    %c0_i32 = arith.constant 0 : i32
    %c0_i32_0 = arith.constant 0 : i32
    return %arg0, %c0_i32, %arg1 : i32, i32, i32
  }
  func.func @transform_2(%arg0: i32, %arg1: i32) -> (i32, i32, i32) {
    %c0_i32 = arith.constant 0 : i32
    %c0_i32_0 = arith.constant 0 : i32
    %c0_i32_1 = arith.constant 0 : i32
    return %arg0, %c0_i32, %c0_i32_0 : i32, i32, i32
  }
}

</mosaic_0001>

<llo_original>
// kernel: focal_loss.1
$region0: #{focal_loss.1}
  #allocation0 [shape = 'u32[]', space=smem, size = 0x4, offset = 0x4, fixed_abs, tag = 'smem constant byte address 0x4 - core index']
  #allocation1 [shape = 'u32[144,128]{1,0:T(1,128)}', space=vmem, size = 0x12000, scoped, tag = 'internal scratch']
  %s0 = inlined_call_operand.vmem [shape: f32[2,4,256], index: 0, kind: input, shape index: {}]
  %s1 = inlined_call_operand.vmem [shape: s32[2,1,256], index: 1, kind: input, shape index: {}]
  %s2 = inlined_call_operand.vmem [shape: f32[2,1,256], index: 2, kind: output, shape index: {}]
  %s3 = sld [smem:[#allocation0]]
  $region45: #{focal_loss.1} parent=0
    _
  %s5 = ssub.s32 1, %s3
  %s6 = scalar_select 0, %s5, %s3
  loop: start=0, step=1, limit=4
  $region2: #{focal_loss.1} parent=0 // loop_pre_header
    _
  $region3: #{focal_loss.1} parent=0 // loop_header
    %s8 = sphi 0, %s12
    %p9 = scmp.ge.s32.totalorder %s8, 4
    %s15 = sphi 0, %s27
    %s16 = sphi 0, %s23
    %s17 = sphi 0, %s15
    %s18 = sphi 0, %s16
    %s19 = sphi 0, %s17
    %s20 = sphi 0, %s18
    %s32 = sphi 0, %s34
    %s35 = sphi 0, %s32
    %s36 = sphi 0, %s35
    %s52 = sphi 0, %s36
    %s60 = sphi 0, %s62
    %s63 = sphi 0, %s60
    %s64 = sphi 0, %s63
    %s80 = sphi 0, %s64
    %s86 = sphi 0, %s88
    %s89 = sphi 0, %s86
    %s90 = sphi 0, %s89
    %s106 = sphi 0, %s90
  $region4: #{focal_loss.1} parent=0 // loop_header_branch
    %11 = sbr.rel (%p9) target = $region8
  $region5: #{focal_loss.1} parent=0 // loop_body
    %s13 = ssub.s32 %s8, 1
    %s14 = ssub.s32 %s8, 2
    %s21 = sadd.s32 1, %s16
    %p22 = scmp.ge.s32.totalorder %s21, 1
    %s23 = scalar_select %p22, 0, %s21
    %s24 = sadd.s32 1, %s15
    %s25 = scalar_select %p22, %s24, %s15
    %p26 = scmp.ge.s32.totalorder %s25, 2
    %s27 = scalar_select %p26, 0, %s25
    %s28 = ssub.s32 %s15, %s27
    %s29 = ssub.s32 %s16, %s23
    %s30 = sor.u32 %s28, %s29
    %p31 = scmp.eq.s32.totalorder %s30, 0
    %s33 = sadd.s32 %s32, 1
    %s34 = scalar_select %p31, %s32, %s33
    %p37 = pneg %p31
    %p38 = scmp.eq.s32.totalorder %s8, 1
    %p39 = por %p37, %p38
    %p40 = scmp.ne.s32.totalorder %s32, %s35
    %p41 = scmp.eq.s32.totalorder %s8, 0
    %p42 = por %p40, %p41
    %p43 = scmp.ne.s32.totalorder %s32, %s35
    %p44 = scmp.eq.s32.totalorder %s13, 1
    %p45 = por %p43, %p44
    %p46 = scmp.ne.s32.totalorder %s35, %s36
    %p47 = scmp.eq.s32.totalorder %s13, 0
    %p48 = por %p46, %p47
    %p49 = scmp.ne.s32.totalorder %s35, %s36
    %p50 = scmp.eq.s32.totalorder %s14, 1
    %p51 = por %p49, %p50
    %p53 = scmp.ne.s32.totalorder %s36, %s52
    %p54 = scmp.eq.s32.totalorder %s14, 0
    %p55 = por %p53, %p54
    %s56 = ssub.s32 %s15, %s27
    %s57 = ssub.s32 %s16, %s23
    %s58 = sor.u32 %s56, %s57
    %p59 = scmp.eq.s32.totalorder %s58, 0
    %s61 = sadd.s32 %s60, 1
    %s62 = scalar_select %p59, %s60, %s61
    %p65 = pneg %p59
    %p66 = scmp.eq.s32.totalorder %s8, 1
    %p67 = por %p65, %p66
    %p68 = scmp.ne.s32.totalorder %s60, %s63
    %p69 = scmp.eq.s32.totalorder %s8, 0
    %p70 = por %p68, %p69
    %p71 = scmp.ne.s32.totalorder %s60, %s63
    %p72 = scmp.eq.s32.totalorder %s13, 1
    %p73 = por %p71, %p72
    %p74 = scmp.ne.s32.totalorder %s63, %s64
    %p75 = scmp.eq.s32.totalorder %s13, 0
    %p76 = por %p74, %p75
    %p77 = scmp.ne.s32.totalorder %s63, %s64
    %p78 = scmp.eq.s32.totalorder %s14, 1
    %p79 = por %p77, %p78
    %p81 = scmp.ne.s32.totalorder %s64, %s80
    %p82 = scmp.eq.s32.totalorder %s14, 0
    %p83 = por %p81, %p82
    %s84 = ssub.s32 %s15, %s27
    %p85 = scmp.eq.s32.totalorder %s84, 0
    %s87 = sadd.s32 %s86, 1
    %s88 = scalar_select %p85, %s86, %s87
    %p91 = pneg %p85
    %p92 = scmp.eq.s32.totalorder %s8, 1
    %p93 = por %p91, %p92
    %p94 = scmp.ne.s32.totalorder %s86, %s89
    %p95 = scmp.eq.s32.totalorder %s8, 0
    %p96 = por %p94, %p95
    %p97 = scmp.ne.s32.totalorder %s86, %s89
    %p98 = scmp.eq.s32.totalorder %s13, 1
    %p99 = por %p97, %p98
    %p100 = scmp.ne.s32.totalorder %s89, %s90
    %p101 = scmp.eq.s32.totalorder %s13, 0
    %p102 = por %p100, %p101
    %p103 = scmp.ne.s32.totalorder %s89, %s90
    %p104 = scmp.eq.s32.totalorder %s14, 1
    %p105 = por %p103, %p104
    %p107 = scmp.ne.s32.totalorder %s90, %s106
    %p108 = scmp.eq.s32.totalorder %s14, 0
    %p109 = por %p107, %p108
    %p110 = scmp.le.s32.totalorder 1, %s8
    %p111 = scmp.lt.s32.totalorder %s8, 3
    %p112 = pnand %p110, %p111
    %p113 = pneg %p112
    // Predicated region
    $region9: #{focal_loss.1} parent=5 // pred_check
      _
    $region10: #{focal_loss.1} parent=5 // pred_check_branch
      %115 = sbr.rel (%p112) target = $region12
    $region11: #{focal_loss.1} parent=5 // pred_region
      %s116 = ssub.s32 %s8, 1
    $region12: #{focal_loss.1} parent=5 // pred_fallthru
      _
    %p117 = scmp.lt.s32.totalorder %s8, 2
    // Predicated region
    $region13: #{focal_loss.1} parent=5 // pred_check
      %p118 = pneg %p117
    $region14: #{focal_loss.1} parent=5 // pred_check_branch
      %120 = sbr.rel (%p118) target = $region16
    $region15: #{focal_loss.1} parent=5 // pred_region
      // Predicated region
      $region17: #{focal_loss.1} parent=15 // pred_check
        %p121 = pneg %p42
      $region18: #{focal_loss.1} parent=15 // pred_check_branch
        %123 = sbr.rel (%p121) target = $region20
      $region19: #{focal_loss.1} parent=15 // pred_region
        %s124 = smul.u32 2, %s16
        %p125 = scmp.lt.s32.totalorder %s15, 1
        %s126 = scalar_select %p125, %s15, 1
        %p127 = scmp.lt.s32.totalorder %s124, 1
        %s128 = scalar_select %p127, %s124, 1
        %s129 = smul.addr %s126, 2
        %s130 = sadd.s32 %s128, %s129
        %s131 = smul.addr %s130, 4
        %s132 = scalar_lea.vmem %s0, %s131
        %s133 = smul.u32 2, %s16
      $region20: #{focal_loss.1} parent=15 // pred_fallthru
        _
      // Predicated region
      $region21: #{focal_loss.1} parent=15 // pred_check
        %p134 = pneg %p70
      $region22: #{focal_loss.1} parent=15 // pred_check_branch
        %136 = sbr.rel (%p134) target = $region24
      $region23: #{focal_loss.1} parent=15 // pred_region
        %s137 = smul.u32 2, %s16
        %p138 = scmp.lt.s32.totalorder %s15, 1
        %s139 = scalar_select %p138, %s15, 1
        %p140 = scmp.lt.s32.totalorder %s137, 1
        %s141 = scalar_select %p140, %s137, 1
        %s142 = smul.addr %s139, 2
        %s143 = sadd.s32 %s141, %s142
        %s144 = scalar_lea.vmem %s1, %s143
        %s145 = smul.u32 2, %s16
      $region24: #{focal_loss.1} parent=15 // pred_fallthru
        _
    $region16: #{focal_loss.1} parent=5 // pred_fallthru
      _
    %p146 = scmp.le.s32.totalorder 1, %s8
    %p147 = scmp.lt.s32.totalorder %s8, 3
    %p148 = pnand %p146, %p147
    %p149 = pneg %p148
    // Predicated region
    $region25: #{focal_loss.1} parent=5 // pred_check
      _
    $region26: #{focal_loss.1} parent=5 // pred_check_branch
      %151 = sbr.rel (%p148) target = $region28
    $region27: #{focal_loss.1} parent=5 // pred_region
      %s152 = ssub.s32 %s8, 1
      %s153 = smul.u32 2, %s18
      %p154 = scmp.lt.s32.totalorder %s17, 1
      %s155 = scalar_select %p154, %s17, 1
      %p156 = scmp.lt.s32.totalorder %s153, 1
      %s157 = scalar_select %p156, %s153, 1
      %s158 = smul.addr %s155, 2
      %s159 = sadd.s32 %s157, %s158
      %s160 = smul.addr %s159, 4
      %s161 = scalar_lea.vmem %s0, %s160
      %p162 = pneg %p48
      %p163 = pneg %p45
      %s164 = smul.u32 2, %s18
      %p165 = scmp.lt.s32.totalorder %s17, 1
      %s166 = scalar_select %p165, %s17, 1
      %p167 = scmp.lt.s32.totalorder %s164, 1
      %s168 = scalar_select %p167, %s164, 1
      %s169 = smul.addr %s166, 2
      %s170 = sadd.s32 %s168, %s169
      %s171 = scalar_lea.vmem %s1, %s170
      %p172 = pneg %p76
      %p173 = pneg %p73
      %p174 = pneg %p102
      %p175 = pneg %p99
      %p176 = scmp.lt.s32.totalorder %s17, 1
      %s177 = scalar_select %p176, %s17, 1
      %s178 = smul.addr %s177, 2
      %s179 = scalar_lea.vmem %s2, %s178
      %s180 = smul.u32 2, %s18
      %p181 = scmp.lt.s32.totalorder %s17, 1
      %s182 = scalar_select %p181, %s17, 1
      %p183 = scmp.lt.s32.totalorder %s180, 1
      %s184 = scalar_select %p183, %s180, 1
      %s185 = smul.addr %s182, 2
      %s186 = sadd.s32 %s184, %s185
      %s187 = smul.addr %s186, 4
      %s188 = scalar_lea.vmem %s0, %s187
      %s189 = smul.u32 2, %s18
      %s190 = smul.u32 2, %s18
      %p191 = scmp.lt.s32.totalorder %s17, 1
      %s192 = scalar_select %p191, %s17, 1
      %p193 = scmp.lt.s32.totalorder %s190, 1
      %s194 = scalar_select %p193, %s190, 1
      %s195 = smul.addr %s192, 2
      %s196 = sadd.s32 %s194, %s195
      %s197 = scalar_lea.vmem %s1, %s196
      %s198 = smul.u32 2, %s18
      %p199 = scmp.lt.s32.totalorder %s17, 1
      %s200 = scalar_select %p199, %s17, 1
      %s201 = smul.addr %s200, 2
      %s202 = scalar_lea.vmem %s2, %s201
      %p203 = scmp.eq.s32.totalorder %s18, 0
      // Predicated region
      $region29: #{focal_loss.1} parent=27 // pred_check
        %p204 = pneg %p203
      $region30: #{focal_loss.1} parent=27 // pred_check_branch
        %206 = sbr.rel (%p204) target = $region32
      $region31: #{focal_loss.1} parent=27 // pred_region
        %v207 = vlaneseq
        %vm208 = vcmp.ge.s32.totalorder %v207, 0
        %vm209 = vcmp.lt.s32.totalorder %v207, 256
        %vm210 = vmand %vm208, %vm209
        %211 = vst.msk [vmem:[%s202] sm:$0x3] %vm210, 0.0
      $region32: #{focal_loss.1} parent=27 // pred_fallthru
        _
      %v212 = vld [vmem:[%s188] sm:$0xff]
      %v213 = vld [vmem:[%s197] sm:$0x3]
      %v215 = vcombine.high %v212, %v212
      %vm217 = vcmask 1043456
      %v218 = vsel %vm217, %v212, -inf
      %v219 = vrot.slane %v218, 4
      %v220 = vmax.f32 %v218, %v219
      %v221 = vrot.slane %v220, 2
      %v222 = vmax.f32 %v220, %v221
      %v223 = vrot.slane %v222, 1
      %v224 = vmax.f32 %v222, %v223
      %v225 = vsel %vm217, %v215, -inf
      %v226 = vrot.slane %v225, 4
      %v227 = vmax.f32 %v225, %v226
      %v228 = vrot.slane %v227, 2
      %v229 = vmax.f32 %v227, %v228
      %v230 = vrot.slane %v229, 1
      %v231 = vmax.f32 %v229, %v230
      %v234 = vcombine.low %v224, %v231
      %v236 = vsub.f32 %v212, %v234
      %v237 = vmul.f32 %v236, 1.442695
      %v238 = vpow.pop %v237
      %v240 = vcombine.high %v238, %v238
      %v242 = vsel %vm217, %v238, 0.0
      %v243 = vrot.slane %v242, 4
      %v244 = vadd.f32 %v242, %v243
      %v245 = vrot.slane %v244, 2
      %v246 = vadd.f32 %v244, %v245
      %v247 = vrot.slane %v246, 1
      %v248 = vadd.f32 %v246, %v247
      %v249 = vsel %vm217, %v240, 0.0
      %v250 = vrot.slane %v249, 4
      %v251 = vadd.f32 %v249, %v250
      %v252 = vrot.slane %v251, 2
      %v253 = vadd.f32 %v251, %v252
      %v254 = vrot.slane %v253, 1
      %v255 = vadd.f32 %v253, %v254
      %v256 = vlog2.pop %v248
      %v257 = vmul.f32 %v256, 0.6931472
      %v258 = vlog2.pop %v255
      %v259 = vmul.f32 %v258, 0.6931472
      %v260 = vlaneseq
      %v261 = vshrl.u32 %v260, 7
      %v262 = vlaneseq
      %v263 = vshrl.u32 %v262, 7
      %v264 = vsub.s32 0, %v263
      %v265 = vrot.slane %v213, %v264
      %v266 = vlaneseq
      %v267 = vshrl.u32 %v266, 7
      %v268 = vsub.s32 1, %v267
      %v269 = vrot.slane %v213, %v268
      %vm270 = vcmp.eq.s32.totalorder %v261, %v265
      %vm271 = vcmp.eq.s32.totalorder %v261, %v269
      %v273 = vcombine.high %v236, %v236
      %v275 = vsel %vm270, %v236, 0.0
      %v276 = vsel %vm271, %v273, 0.0
      %v277 = vsel %vm217, %v275, 0.0
      %v278 = vrot.slane %v277, 4
      %v279 = vadd.f32 %v277, %v278
      %v280 = vrot.slane %v279, 2
      %v281 = vadd.f32 %v279, %v280
      %v282 = vrot.slane %v281, 1
      %v283 = vadd.f32 %v281, %v282
      %v284 = vsel %vm217, %v276, 0.0
      %v285 = vrot.slane %v284, 4
      %v286 = vadd.f32 %v284, %v285
      %v287 = vrot.slane %v286, 2
      %v288 = vadd.f32 %v286, %v287
      %v289 = vrot.slane %v288, 1
      %v290 = vadd.f32 %v288, %v289
      %v291 = vsub.f32 %v283, %v257
      %v292 = vsub.f32 %v290, %v259
      %v293 = vmul.f32 %v291, 1.442695
      %v294 = vpow.pop %v293
      %v295 = vmul.f32 %v292, 1.442695
      %v296 = vpow.pop %v295
      %v297 = vsub.f32 1.0, %v294
      %v298 = vsub.f32 1.0, %v296
      %v299 = vmul.f32 %v297, %v297
      %v300 = vmul.f32 %v298, %v298
      %v301 = vsub.f32 0.0, %v299
      %v302 = vsub.f32 0.0, %v300
      %v303 = vmul.f32 %v301, %v291
      %v304 = vmul.f32 %v302, %v292
      %v305 = vlaneseq
      %v306 = vand.u32 %v305, 127
      %v307 = vadd.s32 %v306, 128
      %s308 = smul.u32 %s18, 256
      %s309 = ssub.s32 256, %s308
      %v310 = vstv %s309
      %vm311 = vcmp.lt.s32.totalorder %v306, %v310
      %vm312 = vcmp.lt.s32.totalorder %v307, %v310
      %v313 = vsel %vm311, %v303, 0.0
      %v314 = vsel %vm312, %v304, 0.0
      %v315 = vld [vmem:[%s202] sm:$0x3]
      %v318 = vcombine.low %v313, %v314
      %v320 = vunpack.c.l.s4 1966171168
      %v321 = vunpack.c.0.s8 %v320
      %v322 = vlaneseq
      %v323 = vshrl.u32 %v322, 7
      %v324 = vsub.s32 %v321, %v323
      %v325 = vrot.slane %v318, %v324
      %v327 = vunpack.c.l.s4 1966171168
      %v328 = vunpack.c.0.s8 %v327
      %v329 = vlaneseq
      %v330 = vshrl.u32 %v329, 7
      %v331 = vsub.s32 %v328, %v330
      %v332 = vrot.slane %v325, %v331
      %v334 = vadd.f32 %v315, %v332
      %v335 = vlaneseq
      %vm336 = vcmp.ge.s32.totalorder %v335, 0
      %vm337 = vcmp.lt.s32.totalorder %v335, 256
      %vm338 = vmand %vm336, %vm337
      %339 = vst.msk [vmem:[%s202] sm:$0x3] %vm338, %v334
      %p340 = scmp.lt.s32.totalorder %s17, 1
      %s341 = scalar_select %p340, %s17, 1
      %s342 = smul.addr %s341, 2
      %s343 = scalar_lea.vmem %s2, %s342
      // Predicated region
      $region33: #{focal_loss.1} parent=27 // pred_check
        %p344 = pneg %p99
      $region34: #{focal_loss.1} parent=27 // pred_check_branch
        %346 = sbr.rel (%p344) target = $region36
      $region35: #{focal_loss.1} parent=27 // pred_region
        _
      $region36: #{focal_loss.1} parent=27 // pred_fallthru
        _
    $region28: #{focal_loss.1} parent=5 // pred_fallthru
      _
    %p347 = scmp.le.s32.totalorder 2, %s8
    // Predicated region
    $region37: #{focal_loss.1} parent=5 // pred_check
      %p348 = pneg %p347
    $region38: #{focal_loss.1} parent=5 // pred_check_branch
      %350 = sbr.rel (%p348) target = $region40
    $region39: #{focal_loss.1} parent=5 // pred_region
      %s351 = ssub.s32 %s8, 2
      // Predicated region
      $region41: #{focal_loss.1} parent=39 // pred_check
        %p352 = pneg %p105
      $region42: #{focal_loss.1} parent=39 // pred_check_branch
        %354 = sbr.rel (%p352) target = $region44
      $region43: #{focal_loss.1} parent=39 // pred_region
        %p355 = scmp.lt.s32.totalorder %s19, 1
        %s356 = scalar_select %p355, %s19, 1
        %s357 = smul.addr %s356, 2
        %s358 = scalar_lea.vmem %s2, %s357
      $region44: #{focal_loss.1} parent=39 // pred_fallthru
        _
    $region40: #{focal_loss.1} parent=5 // pred_fallthru
      _
  $region6: #{focal_loss.1} parent=0 // loop_footer
    %s12 = sadd.s32 1, %s8
  $region7: #{focal_loss.1} parent=0 // loop_footer_branch
    %7 = sbr.rel target = $region3
  $region8: #{focal_loss.1} parent=0 // loop_exit
    _

</llo_original>
